<compile_context>
chip_gen: v7x
topology: tpu7x:2x2x1
jax: 0.10.0
libtpu: 0.0.40
codegen_flags: <defaults>
</compile_context>

<pallas_src>
import jax
import jax.numpy as jnp
from jax.experimental import pallas as pl
from jax.experimental.pallas import tpu as pltpu


# ----------------------------- Pallas kernel --------------------------------
def _rope_kernel(x_ref, cos_ref, sin_ref, o_ref):
    # x_ref / o_ref : (bh_tile, dim, HW)   dim on sublane, HW lane-dense
    # cos_ref/sin_ref: (half, HW)          grid-invariant tables
    half = cos_ref.shape[0]

    x = x_ref[...].astype(jnp.float32)          # one dense full-tile load
    cos = cos_ref[...]                          # (half, HW), f32
    sin = sin_ref[...]

    x1 = x[:, :half, :]                         # rotary pair (i, i+half)
    x2 = x[:, half:, :]

    # Two direct full-lane-width stores into the output halves -- no
    # concatenate temp, no extra output copy.
    o_ref[:, :half, :] = (x1 * cos - x2 * sin).astype(o_ref.dtype)
    o_ref[:, half:, :] = (x1 * sin + x2 * cos).astype(o_ref.dtype)


def _choose_bh_tile(bh, hw, dim, itemsize, target_bytes=4 << 20):
    """Largest divisor of `bh` that keeps tiles <= ~4 MiB and grid >= 2 steps."""
    max_bh = max(1, target_bytes // max(1, hw * dim * itemsize))
    bh_tile = min(bh, max_bh)
    if bh >= 2:
        bh_tile = min(bh_tile, pl.cdiv(bh, 2))   # keep a 2-way parallel grid (v7x)
    while bh % bh_tile:                           # keep the grid exact
        bh_tile -= 1
    return bh_tile


def apply_mixed_rope_pallas(x, cos, sin):
    """x: (B, heads, H, W, dim); cos/sin: (H, W, dim//2) gathered at (pos_x, pos_y)."""
    B, Hh, H, W, dim = x.shape
    half = dim // 2
    BH, HW = B * Hh, H * W

    # Layout plumbing (wrapper-side, per review): big axis -> lanes.
    x_k = jnp.transpose(x.reshape(BH, HW, dim), (0, 2, 1))            # (BH, dim, HW)
    cos_k = jnp.transpose(cos.reshape(HW, half), (1, 0)).astype(jnp.float32)  # (half, HW)
    sin_k = jnp.transpose(sin.reshape(HW, half), (1, 0)).astype(jnp.float32)

    bh_tile = _choose_bh_tile(BH, HW, dim, x_k.dtype.itemsize)
    grid = (BH // bh_tile,)

    out_k = pl.pallas_call(
        _rope_kernel,
        out_shape=jax.ShapeDtypeStruct((BH, dim, HW), x.dtype),
        grid_spec=pltpu.PrefetchScalarGridSpec(
            num_scalar_prefetch=0,
            grid=grid,
            in_specs=[
                # (bh_tile, dim, HW): last two dims are (8, HW) -> (8,128)-legal
                # (dim % 8 == 0; HW block always equals the full array dim).
                pl.BlockSpec((bh_tile, dim, HW), lambda i: (i, 0, 0)),
                # Grid-invariant tables, resident across all steps.
                pl.BlockSpec((half, HW), lambda i: (0, 0)),
                pl.BlockSpec((half, HW), lambda i: (0, 0)),
            ],
            out_specs=pl.BlockSpec((bh_tile, dim, HW), lambda i: (i, 0, 0)),
        ),
        compiler_params=pltpu.CompilerParams(
            dimension_semantics=("parallel",),
            # Tiles are KiB-scale here; for production shapes raise
            # vmem_limit_bytes and re-derive bh_tile for v7x's 64 MiB VMEM.
        ),
    )(x_k, cos_k, sin_k)

    return jnp.transpose(out_k, (0, 2, 1)).reshape(B, Hh, H, W, dim)


# --------------------------- module-equivalent glue --------------------------
class VisionRoPEMixedPallas:
    def __init__(self, dim, max_position=14, base=100):
        assert dim % 4 == 0
        self.dim = dim
        self.max_position = max_position
        self.base = base
        quarter = dim // 4
        inv_freq = 1.0 / (base ** (jnp.arange(0, quarter, 2, dtype=jnp.float32) / quarter))
        # Reproduce torch's `Parameter(randn(dim//4)).copy_(inv_freq)` broadcast.
        if inv_freq.shape[0] == 1:
            freq = jnp.broadcast_to(inv_freq, (quarter,))
        elif inv_freq.shape[0] == quarter:
            freq = inv_freq
        else:
            raise ValueError(
                "VisionRoPEMixed's copy_(inv_freq) only broadcasts when dim == 8 "
                f"(got dim={dim}); the original PyTorch module has the same limit.")
        self.freq_x = freq.astype(jnp.float32)
        self.freq_y = freq.astype(jnp.float32)
        self._build_cache(max_position)

    def _build_cache(self, seq_len):
        pos = jnp.arange(seq_len, dtype=jnp.float32)
        freqs_x = pos[:, None] * self.freq_x[None, :]               # (S, dim//4)
        freqs_y = pos[:, None] * self.freq_y[None, :]               # (S, dim//4)
        freqs_mixed = freqs_x[:, None, :] + freqs_y[None, :, :]     # (S, S, dim//4)
        emb = jnp.concatenate([freqs_mixed, freqs_mixed], axis=-1)  # (S, S, dim//2)
        self.cos_cache = jnp.cos(emb)
        self.sin_cache = jnp.sin(emb)

    def __call__(self, x, pos_x=None, pos_y=None):
        # x: [batch, heads, height, width, dim]
        H, W = x.shape[2], x.shape[3]
        current_max = max(H if pos_x is None else len(pos_x),
                          W if pos_y is None else len(pos_y))
        # Host-level cache growth, mirroring the PyTorch module (stateful; do
        # not wrap __call__ in jax.jit — jit apply_mixed_rope_pallas instead).
        if current_max > self.max_position:
            self._build_cache(current_max)
            self.max_position = current_max
        if pos_x is None:
            pos_x = jnp.arange(H)
        if pos_y is None:
            pos_y = jnp.arange(W)
        cos = self.cos_cache[pos_x][:, pos_y]   # (H, W, dim//2)
        sin = self.sin_cache[pos_x][:, pos_y]
        return apply_mixed_rope_pallas(x, cos, sin)


# ------------------------------- reference -----------------------------------
def _reference(x, cos, sin, dim):
    c = cos[None, None]
    s = sin[None, None]
    x1 = x[..., : dim // 2]
    x2 = x[..., dim // 2:]
    return jnp.concatenate([x1 * c - x2 * s, x1 * s + x2 * c], axis=-1)


if __name__ == "__main__":
    batch, heads, H, W, dim = 2, 2, 16, 16, 8   # H*W = 256 -> lane-dense tiles
    key = jax.random.PRNGKey(0)
    x = jax.random.normal(key, (batch, heads, H, W, dim), dtype=jnp.float32)

    rope = VisionRoPEMixedPallas(dim=dim, max_position=16, base=100)
    out = jax.block_until_ready(rope(x))

    # sanity check against a pure-JAX reference of the same math
    cos = rope.cos_cache[jnp.arange(H)][:, jnp.arange(W)]
    sin = rope.sin_cache[jnp.arange(H)][:, jnp.arange(W)]
    ref = _reference(x, cos, sin, dim)
    assert out.shape == (batch, heads, H, W, dim)
    assert jnp.allclose(out, ref, atol=1e-5, rtol=1e-5)

    print("KERNEL_OK")
</pallas_src>

<mosaic_0001>
module attributes {stable_mosaic.version = 11 : i64} {
  func.func @_rope_kernel(%arg0: i32, %arg1: memref<2x8x256xf32, #tpu.memory_space<vmem>>, %arg2: memref<4x256xf32, #tpu.memory_space<vmem>>, %arg3: memref<4x256xf32, #tpu.memory_space<vmem>>, %arg4: memref<2x8x256xf32, #tpu.memory_space<vmem>>) attributes {dimension_semantics = [#tpu.dimension_semantics<parallel>], iteration_bounds = array<i64: 2>, scalar_prefetch = 0 : i64, scratch_operands = 0 : i64, tpu.core_type = #tpu.core_type<tc>, window_params = [{transform_indices = @transform_0, window_bounds = array<i64: 2, 8, 256>}, {pipeline_mode = #tpu.pipeline_mode<synchronous>, transform_indices = @transform_1, window_bounds = array<i64: 4, 256>}, {pipeline_mode = #tpu.pipeline_mode<synchronous>, transform_indices = @transform_2, window_bounds = array<i64: 4, 256>}, {transform_indices = @transform_3, window_bounds = array<i64: 2, 8, 256>}]} {
    %c0 = arith.constant 0 : index
    %c0_0 = arith.constant 0 : index
    %c0_1 = arith.constant 0 : index
    %0 = vector.load %arg1[%c0, %c0_0, %c0_1] : memref<2x8x256xf32, #tpu.memory_space<vmem>>, vector<2x8x256xf32>
    %c0_2 = arith.constant 0 : index
    %c0_3 = arith.constant 0 : index
    %1 = vector.load %arg2[%c0_2, %c0_3] : memref<4x256xf32, #tpu.memory_space<vmem>>, vector<4x256xf32>
    %c0_4 = arith.constant 0 : index
    %c0_5 = arith.constant 0 : index
    %2 = vector.load %arg3[%c0_4, %c0_5] : memref<4x256xf32, #tpu.memory_space<vmem>>, vector<4x256xf32>
    %3 = vector.extract_strided_slice %0 {offsets = [0, 0, 0], sizes = [2, 4, 256], strides = [1, 1, 1]} : vector<2x8x256xf32> to vector<2x4x256xf32>
    %4 = vector.extract_strided_slice %0 {offsets = [0, 4, 0], sizes = [2, 4, 256], strides = [1, 1, 1]} : vector<2x8x256xf32> to vector<2x4x256xf32>
    %5 = vector.shape_cast %1 : vector<4x256xf32> to vector<1x4x256xf32>
    %6 = vector.broadcast %5 : vector<1x4x256xf32> to vector<2x4x256xf32>
    %7 = arith.mulf %3, %6 : vector<2x4x256xf32>
    %8 = vector.shape_cast %2 : vector<4x256xf32> to vector<1x4x256xf32>
    %9 = vector.broadcast %8 : vector<1x4x256xf32> to vector<2x4x256xf32>
    %10 = arith.mulf %4, %9 : vector<2x4x256xf32>
    %11 = arith.subf %7, %10 : vector<2x4x256xf32>
    %c0_6 = arith.constant 0 : index
    %c0_7 = arith.constant 0 : index
    %c0_8 = arith.constant 0 : index
    %12 = vector.load %arg4[%c0_6, %c0_7, %c0_8] : memref<2x8x256xf32, #tpu.memory_space<vmem>>, vector<2x4x256xf32>
    tpu.vector_store %arg4[%c0_6, %c0_7, %c0_8], %11 {strides = array<i32>} : memref<2x8x256xf32, #tpu.memory_space<vmem>>, vector<2x4x256xf32>,
    %13 = vector.shape_cast %2 : vector<4x256xf32> to vector<1x4x256xf32>
    %14 = vector.broadcast %13 : vector<1x4x256xf32> to vector<2x4x256xf32>
    %15 = arith.mulf %3, %14 : vector<2x4x256xf32>
    %16 = vector.shape_cast %1 : vector<4x256xf32> to vector<1x4x256xf32>
    %17 = vector.broadcast %16 : vector<1x4x256xf32> to vector<2x4x256xf32>
    %18 = arith.mulf %4, %17 : vector<2x4x256xf32>
    %19 = arith.addf %15, %18 : vector<2x4x256xf32>
    %c0_9 = arith.constant 0 : index
    %c4 = arith.constant 4 : index
    %c0_10 = arith.constant 0 : index
    %20 = vector.load %arg4[%c0_9, %c4, %c0_10] : memref<2x8x256xf32, #tpu.memory_space<vmem>>, vector<2x4x256xf32>
    tpu.vector_store %arg4[%c0_9, %c4, %c0_10], %19 {strides = array<i32>} : memref<2x8x256xf32, #tpu.memory_space<vmem>>, vector<2x4x256xf32>,
    return
  }
  func.func @transform_0(%arg0: i32) -> (i32, i32, i32) {
    %c0_i32 = arith.constant 0 : i32
    %c0_i32_0 = arith.constant 0 : i32
    %c0_i32_1 = arith.constant 0 : i32
    return %arg0, %c0_i32, %c0_i32_0 : i32, i32, i32
  }
  func.func @transform_1(%arg0: i32) -> (i32, i32) {
    %c0_i32 = arith.constant 0 : i32
    %c0_i32_0 = arith.constant 0 : i32
    %c0_i32_1 = arith.constant 0 : i32
    return %c0_i32, %c0_i32_0 : i32, i32
  }
  func.func @transform_2(%arg0: i32) -> (i32, i32) {
    %c0_i32 = arith.constant 0 : i32
    %c0_i32_0 = arith.constant 0 : i32
    %c0_i32_1 = arith.constant 0 : i32
    return %c0_i32, %c0_i32_0 : i32, i32
  }
  func.func @transform_3(%arg0: i32) -> (i32, i32, i32) {
    %c0_i32 = arith.constant 0 : i32
    %c0_i32_0 = arith.constant 0 : i32
    %c0_i32_1 = arith.constant 0 : i32
    return %arg0, %c0_i32, %c0_i32_0 : i32, i32, i32
  }
}

</mosaic_0001>

<llo_original>
// kernel: tpu_custom_call.1
$region0: #{tpu_custom_call.1}
  #allocation0 [shape = 'u32[]', space=smem, size = 0x4, offset = 0x4, fixed_abs, tag = 'smem constant byte address 0x4 - core index']
  #allocation1 [shape = 'u32[144,128]{1,0:T(1,128)}', space=vmem, size = 0x12000, scoped, tag = 'internal scratch']
  %s0 = inlined_call_operand.hbm [shape: f32[4,8,256], index: 0, kind: input, shape index: {}]
  %s1 = inlined_call_operand.hbm [shape: f32[4,256], index: 1, kind: input, shape index: {}]
  %s2 = inlined_call_operand.hbm [shape: f32[4,256], index: 2, kind: input, shape index: {}]
  %s3 = inlined_call_operand.hbm [shape: f32[4,8,256], index: 3, kind: output, shape index: {}]
  %s4 = sld [smem:[#allocation0]]
  $region57: #{tpu_custom_call.1} parent=0
    _
  %s6 = ssub.s32 1, %s4
  %s7 = scalar_select 0, %s6, %s4
  $region1: #{tpu_custom_call.1} parent=0
    #allocation2 [shape = 'u8[32768]{0}', space=vmem, size = 0x8000, scoped, tag = 'input window, operand 0']
    #allocation3 [shape = 's32[2]{0}', space=sflag, size = 0x8, scoped, tag = 'scoped memory for tpu_custom_call.1']
    #allocation4 [shape = 's32[2]{0}', space=sflag, size = 0x8, scoped, tag = 'scoped memory for tpu_custom_call.1']
    #allocation5 [shape = 'u8[4096]{0}', space=vmem, size = 0x1000, scoped, tag = 'input window, operand 1, single buffered']
    #allocation6 [shape = 's32[1]{0}', space=sflag, size = 0x4, scoped, tag = 'scoped memory for tpu_custom_call.1']
    #allocation7 [shape = 'u8[4096]{0}', space=vmem, size = 0x1000, scoped, tag = 'input window, operand 2, single buffered']
    #allocation8 [shape = 'u8[32768]{0}', space=vmem, size = 0x8000, scoped, tag = 'output window, operand 0']
    %8 = vsyncpa [#allocation3], 0
    %s9 = scalar_lea.sflag [#allocation3], 1
    %10 = vsyncpa %s9, 0
    %11 = vsyncpa [#allocation6], 0
    %12 = vsyncpa [#allocation4], 0
    %s13 = scalar_lea.sflag [#allocation4], 1
    %14 = vsyncpa %s13, 0
    loop: start=0, step=1, limit=4
    $region2: #{tpu_custom_call.1} parent=1 // loop_pre_header
      _
    $region3: #{tpu_custom_call.1} parent=1 // loop_header
      %s16 = sphi 0, %s20
      %p17 = scmp.ge.s32.totalorder %s16, 4
      %s26 = sphi 0, %s28
      %s29 = sphi 0, %s26
      %s30 = sphi 0, %s29
      %s46 = sphi 0, %s30
      %s50 = sphi 0, %s50
      %s52 = sphi 0, %s50
      %s53 = sphi 0, %s52
      %s67 = sphi 0, %s53
      %s71 = sphi 0, %s71
      %s73 = sphi 0, %s71
      %s74 = sphi 0, %s73
      %s88 = sphi 0, %s74
      %s94 = sphi 0, %s96
      %s97 = sphi 0, %s94
      %s98 = sphi 0, %s97
      %s114 = sphi 0, %s98
    $region4: #{tpu_custom_call.1} parent=1 // loop_header_branch
      %19 = sbr.rel (%p17) target = $region8
    $region5: #{tpu_custom_call.1} parent=1 // loop_body
      %s21 = ssub.s32 %s16, 1
      %s22 = ssub.s32 %s16, 2
      %s23 = sadd.s32 %s16, 1
      %s24 = ssub.s32 %s16, %s23
      %p25 = scmp.eq.s32.totalorder %s24, 0
      %s27 = sadd.s32 %s26, 1
      %s28 = scalar_select %p25, %s26, %s27
      %p31 = pneg %p25
      %p32 = scmp.eq.s32.totalorder %s16, 1
      %p33 = por %p31, %p32
      %p34 = scmp.ne.s32.totalorder %s26, %s29
      %p35 = scmp.eq.s32.totalorder %s16, 0
      %p36 = por %p34, %p35
      %p37 = scmp.ne.s32.totalorder %s26, %s29
      %p38 = scmp.eq.s32.totalorder %s21, 1
      %p39 = por %p37, %p38
      %p40 = scmp.ne.s32.totalorder %s29, %s30
      %p41 = scmp.eq.s32.totalorder %s21, 0
      %p42 = por %p40, %p41
      %p43 = scmp.ne.s32.totalorder %s29, %s30
      %p44 = scmp.eq.s32.totalorder %s22, 1
      %p45 = por %p43, %p44
      %p47 = scmp.ne.s32.totalorder %s30, %s46
      %p48 = scmp.eq.s32.totalorder %s22, 0
      %p49 = por %p47, %p48
      %s51 = sadd.s32 %s50, 1
      %p54 = scmp.eq.s32.totalorder %s16, 1
      %p55 = scmp.ne.s32.totalorder %s50, %s52
      %p56 = scmp.eq.s32.totalorder %s16, 0
      %p57 = por %p55, %p56
      %p58 = scmp.ne.s32.totalorder %s50, %s52
      %p59 = scmp.eq.s32.totalorder %s21, 1
      %p60 = por %p58, %p59
      %p61 = scmp.ne.s32.totalorder %s52, %s53
      %p62 = scmp.eq.s32.totalorder %s21, 0
      %p63 = por %p61, %p62
      %p64 = scmp.ne.s32.totalorder %s52, %s53
      %p65 = scmp.eq.s32.totalorder %s22, 1
      %p66 = por %p64, %p65
      %p68 = scmp.ne.s32.totalorder %s53, %s67
      %p69 = scmp.eq.s32.totalorder %s22, 0
      %p70 = por %p68, %p69
      %s72 = sadd.s32 %s71, 1
      %p75 = scmp.eq.s32.totalorder %s16, 1
      %p76 = scmp.ne.s32.totalorder %s71, %s73
      %p77 = scmp.eq.s32.totalorder %s16, 0
      %p78 = por %p76, %p77
      %p79 = scmp.ne.s32.totalorder %s71, %s73
      %p80 = scmp.eq.s32.totalorder %s21, 1
      %p81 = por %p79, %p80
      %p82 = scmp.ne.s32.totalorder %s73, %s74
      %p83 = scmp.eq.s32.totalorder %s21, 0
      %p84 = por %p82, %p83
      %p85 = scmp.ne.s32.totalorder %s73, %s74
      %p86 = scmp.eq.s32.totalorder %s22, 1
      %p87 = por %p85, %p86
      %p89 = scmp.ne.s32.totalorder %s74, %s88
      %p90 = scmp.eq.s32.totalorder %s22, 0
      %p91 = por %p89, %p90
      %s92 = ssub.s32 %s16, %s23
      %p93 = scmp.eq.s32.totalorder %s92, 0
      %s95 = sadd.s32 %s94, 1
      %s96 = scalar_select %p93, %s94, %s95
      %p99 = pneg %p93
      %p100 = scmp.eq.s32.totalorder %s16, 1
      %p101 = por %p99, %p100
      %p102 = scmp.ne.s32.totalorder %s94, %s97
      %p103 = scmp.eq.s32.totalorder %s16, 0
      %p104 = por %p102, %p103
      %p105 = scmp.ne.s32.totalorder %s94, %s97
      %p106 = scmp.eq.s32.totalorder %s21, 1
      %p107 = por %p105, %p106
      %p108 = scmp.ne.s32.totalorder %s97, %s98
      %p109 = scmp.eq.s32.totalorder %s21, 0
      %p110 = por %p108, %p109
      %p111 = scmp.ne.s32.totalorder %s97, %s98
      %p112 = scmp.eq.s32.totalorder %s22, 1
      %p113 = por %p111, %p112
      %p115 = scmp.ne.s32.totalorder %s98, %s114
      %p116 = scmp.eq.s32.totalorder %s22, 0
      %p117 = por %p115, %p116
      %p118 = scmp.le.s32.totalorder 1, %s16
      %p119 = scmp.lt.s32.totalorder %s16, 3
      %p120 = pnand %p118, %p119
      %p121 = pneg %p120
      // Predicated region
      $region9: #{tpu_custom_call.1} parent=5 // pred_check
        _
      $region10: #{tpu_custom_call.1} parent=5 // pred_check_branch
        %123 = sbr.rel (%p120) target = $region12
      $region11: #{tpu_custom_call.1} parent=5 // pred_region
        %s124 = ssub.s32 %s16, 1
        // Predicated region
        $region13: #{tpu_custom_call.1} parent=11 // pred_check
          %p125 = pneg %p63
        $region14: #{tpu_custom_call.1} parent=11 // pred_check_branch
          %127 = sbr.rel (%p125) target = $region16
        $region15: #{tpu_custom_call.1} parent=11 // pred_region
          %s129 = ssub.s32 128, 128
          %130 = vsyncadd [#allocation6], %s129
          %s132 = sshll.u32 [#allocation5], 4
          %s133 = int_to_ptr.vmem [resolvable:$true] %s132
          %135 = dma.hbm_to_vmem [thread:$0]  %s1, 128, %s133, [#allocation6]
        $region16: #{tpu_custom_call.1} parent=11 // pred_fallthru
          _
        // Predicated region
        $region17: #{tpu_custom_call.1} parent=11 // pred_check
          %p136 = pneg %p84
        $region18: #{tpu_custom_call.1} parent=11 // pred_check_branch
          %138 = sbr.rel (%p136) target = $region20
        $region19: #{tpu_custom_call.1} parent=11 // pred_region
          %s140 = ssub.s32 128, 128
          %141 = vsyncadd [#allocation6], %s140
          %s143 = sshll.u32 [#allocation7], 4
          %s144 = int_to_ptr.vmem [resolvable:$true] %s143
          %146 = dma.hbm_to_vmem [thread:$0]  %s2, 128, %s144, [#allocation6]
        $region20: #{tpu_custom_call.1} parent=11 // pred_fallthru
          _
      $region12: #{tpu_custom_call.1} parent=5 // pred_fallthru
        _
      %p147 = scmp.lt.s32.totalorder %s16, 2
      // Predicated region
      $region21: #{tpu_custom_call.1} parent=5 // pred_check
        %p148 = pneg %p147
      $region22: #{tpu_custom_call.1} parent=5 // pred_check_branch
        %150 = sbr.rel (%p148) target = $region24
      $region23: #{tpu_custom_call.1} parent=5 // pred_region
        // Predicated region
        $region25: #{tpu_custom_call.1} parent=23 // pred_check
          %p151 = pneg %p36
        $region26: #{tpu_custom_call.1} parent=23 // pred_check_branch
          %153 = sbr.rel (%p151) target = $region28
        $region27: #{tpu_custom_call.1} parent=23 // pred_region
          %s154 = sand.u32 %s26, 1
          %s155 = scalar_lea.sflag [#allocation3], %s154
          %s156 = sand.u32 %s26, 1
          %s157 = smul.addr %s156, 32
          %s158 = scalar_lea.vmem [#allocation2], %s157
          %s159 = smul.u32 2, %s16
          %s161 = ssub.s32 512, 512
          %162 = vsyncadd %s155, %s161
          %s163 = smul.addr %s159, 2
          %s164 = smul.addr %s163, 128
          %s165 = scalar_lea.hbm %s0, %s164
          %s166 = sshll.u32 %s158, 4
          %s167 = int_to_ptr.vmem [resolvable:$true] %s166
          %172 = dma.hbm_to_vmem [thread:$0]  %s165, 512, %s167, %s155, 256, 256, 16
        $region28: #{tpu_custom_call.1} parent=23 // pred_fallthru
          _
      $region24: #{tpu_custom_call.1} parent=5 // pred_fallthru
        _
      %p173 = scmp.le.s32.totalorder 1, %s16
      %p174 = scmp.lt.s32.totalorder %s16, 3
      %p175 = pnand %p173, %p174
      %p176 = pneg %p175
      // Predicated region
      $region29: #{tpu_custom_call.1} parent=5 // pred_check
        _
      $region30: #{tpu_custom_call.1} parent=5 // pred_check_branch
        %178 = sbr.rel (%p175) target = $region32
      $region31: #{tpu_custom_call.1} parent=5 // pred_region
        %s179 = ssub.s32 %s16, 1
        %s180 = sand.u32 %s29, 1
        %s181 = scalar_lea.sflag [#allocation3], %s180
        %s182 = sand.u32 %s29, 1
        %s183 = smul.addr %s182, 32
        %s184 = scalar_lea.vmem [#allocation2], %s183
        // Predicated region
        $region33: #{tpu_custom_call.1} parent=31 // pred_check
          %p185 = pneg %p42
        $region34: #{tpu_custom_call.1} parent=31 // pred_check_branch
          %187 = sbr.rel (%p185) target = $region36
        $region35: #{tpu_custom_call.1} parent=31 // pred_region
          %188 = dma.done %s181, 512
        $region36: #{tpu_custom_call.1} parent=31 // pred_fallthru
          _
        // Predicated region
        $region37: #{tpu_custom_call.1} parent=31 // pred_check
          %p189 = pneg %p63
        $region38: #{tpu_custom_call.1} parent=31 // pred_check_branch
          %191 = sbr.rel (%p189) target = $region40
        $region39: #{tpu_custom_call.1} parent=31 // pred_region
          %192 = dma.done [#allocation6], 128
        $region40: #{tpu_custom_call.1} parent=31 // pred_fallthru
          _
        // Predicated region
        $region41: #{tpu_custom_call.1} parent=31 // pred_check
          %p193 = pneg %p84
        $region42: #{tpu_custom_call.1} parent=31 // pred_check_branch
          %195 = sbr.rel (%p193) target = $region44
        $region43: #{tpu_custom_call.1} parent=31 // pred_region
          %196 = dma.done [#allocation6], 128
        $region44: #{tpu_custom_call.1} parent=31 // pred_fallthru
          _
        %s197 = sand.u32 %s29, 1
        %s198 = scalar_lea.sflag [#allocation3], %s197
        %s199 = sand.u32 %s29, 1
        %s200 = smul.addr %s199, 32
        %s201 = scalar_lea.vmem [#allocation2], %s200
        %p202 = pneg %p42
        %p203 = pneg %p39
        %p204 = pneg %p63
        %p205 = pneg %p60
        %p206 = pneg %p84
        %p207 = pneg %p81
        %p208 = pneg %p110
        %p209 = pneg %p107
        %s210 = sand.u32 %s97, 1
        %s211 = scalar_lea.sflag [#allocation4], %s210
        %s212 = sand.u32 %s97, 1
        %s213 = smul.addr %s212, 32
        %s214 = scalar_lea.vmem [#allocation8], %s213
        %s215 = smul.u32 2, %s21
        %s216 = smul.u32 2, %s21
        %v217 = vld [vmem:[%s184] sm:$0xff]
        %v218 = vld [vmem:[%s184 + $0x8] sm:$0xff]
        %v219 = vld [vmem:[%s184 + $0x10] sm:$0xff]
        %v220 = vld [vmem:[%s184 + $0x18] sm:$0xff]
        %v221 = vld [vmem:[#allocation5] sm:$0xff]
        %v222 = vld [vmem:[#allocation7] sm:$0xff]
        %v224 = vcombine.high %v221, %v221
        %v226 = vmul.f32 %v217, %v221
        %v227 = vmul.f32 %v218, %v224
        %v228 = vmul.f32 %v219, %v221
        %v229 = vmul.f32 %v220, %v224
        %v231 = vcombine.low %v222, %v222
        %v233 = vmul.f32 %v217, %v231
        %v234 = vmul.f32 %v218, %v222
        %v235 = vmul.f32 %v219, %v231
        %v236 = vmul.f32 %v220, %v222
        %v241 = vrot.slane %v233, 4
        %v242 = vrot.slane %v234, 4
        %v243 = vrot.slane %v235, 4
        %v244 = vrot.slane %v236, 4
        %v249 = vsub.f32 %v226, %v241
        %v250 = vsub.f32 %v227, %v242
        %v251 = vsub.f32 %v228, %v243
        %v252 = vsub.f32 %v229, %v244
        %253 = vst [vmem:[%s214] sm:$0xf] %v249
        %254 = vst [vmem:[%s214 + $0x8] sm:$0xf] %v250
        %255 = vst [vmem:[%s214 + $0x10] sm:$0xf] %v251
        %256 = vst [vmem:[%s214 + $0x18] sm:$0xf] %v252
        %v257 = vcombine.high %v222, %v222
        %v259 = vmul.f32 %v217, %v222
        %v260 = vmul.f32 %v218, %v257
        %v261 = vmul.f32 %v219, %v222
        %v262 = vmul.f32 %v220, %v257
        %v263 = vcombine.low %v221, %v221
        %v265 = vmul.f32 %v217, %v263
        %v266 = vmul.f32 %v218, %v221
        %v267 = vmul.f32 %v219, %v263
        %v268 = vmul.f32 %v220, %v221
        %v273 = vrot.slane %v265, 4
        %v274 = vrot.slane %v266, 4
        %v275 = vrot.slane %v267, 4
        %v276 = vrot.slane %v268, 4
        %v281 = vadd.f32 %v259, %v273
        %v282 = vadd.f32 %v260, %v274
        %v283 = vadd.f32 %v261, %v275
        %v284 = vadd.f32 %v262, %v276
        %v289 = vrot.slane %v281, 4
        %v290 = vrot.slane %v282, 4
        %v291 = vrot.slane %v283, 4
        %v292 = vrot.slane %v284, 4
        %297 = vst [vmem:[%s214] sm:$0xf0] %v289
        %298 = vst [vmem:[%s214 + $0x8] sm:$0xf0] %v290
        %299 = vst [vmem:[%s214 + $0x10] sm:$0xf0] %v291
        %300 = vst [vmem:[%s214 + $0x18] sm:$0xf0] %v292
        %s301 = sand.u32 %s97, 1
        %s302 = scalar_lea.sflag [#allocation4], %s301
        %s303 = sand.u32 %s97, 1
        %s304 = smul.addr %s303, 32
        %s305 = scalar_lea.vmem [#allocation8], %s304
        // Predicated region
        $region45: #{tpu_custom_call.1} parent=31 // pred_check
          %p306 = pneg %p107
        $region46: #{tpu_custom_call.1} parent=31 // pred_check_branch
          %308 = sbr.rel (%p306) target = $region48
        $region47: #{tpu_custom_call.1} parent=31 // pred_region
          %s309 = smul.u32 2, %s21
          %s311 = ssub.s32 512, 512
          %312 = vsyncadd %s302, %s311
          %s313 = smul.addr %s309, 2
          %s314 = smul.addr %s313, 128
          %s315 = scalar_lea.hbm %s3, %s314
          %s316 = sshll.u32 %s305, 4
          %s317 = int_to_ptr.vmem [resolvable:$true] %s316
          %322 = dma.vmem_to_hbm [thread:$0]  %s317, 512, %s315, %s302, 256, 256, 16
        $region48: #{tpu_custom_call.1} parent=31 // pred_fallthru
          _
      $region32: #{tpu_custom_call.1} parent=5 // pred_fallthru
        _
      %p323 = scmp.le.s32.totalorder 2, %s16
      // Predicated region
      $region49: #{tpu_custom_call.1} parent=5 // pred_check
        %p324 = pneg %p323
      $region50: #{tpu_custom_call.1} parent=5 // pred_check_branch
        %326 = sbr.rel (%p324) target = $region52
      $region51: #{tpu_custom_call.1} parent=5 // pred_region
        %s327 = ssub.s32 %s16, 2
        // Predicated region
        $region53: #{tpu_custom_call.1} parent=51 // pred_check
          %p328 = pneg %p113
        $region54: #{tpu_custom_call.1} parent=51 // pred_check_branch
          %330 = sbr.rel (%p328) target = $region56
        $region55: #{tpu_custom_call.1} parent=51 // pred_region
          %s331 = sand.u32 %s98, 1
          %s332 = scalar_lea.sflag [#allocation4], %s331
          %s333 = sand.u32 %s98, 1
          %s334 = smul.addr %s333, 32
          %s335 = scalar_lea.vmem [#allocation8], %s334
          %336 = dma.done %s332, 512
        $region56: #{tpu_custom_call.1} parent=51 // pred_fallthru
          _
      $region52: #{tpu_custom_call.1} parent=5 // pred_fallthru
        _
    $region6: #{tpu_custom_call.1} parent=1 // loop_footer
      %s20 = sadd.s32 1, %s16
    $region7: #{tpu_custom_call.1} parent=1 // loop_footer_branch
      %15 = sbr.rel target = $region3
    $region8: #{tpu_custom_call.1} parent=1 // loop_exit
      _
    %337 = vsyncpa [#allocation3], 1
    %s338 = scalar_lea.sflag [#allocation3], 1
    %339 = vsyncpa %s338, 1
    %340 = vsyncpa [#allocation6], 1
    %341 = vsyncpa [#allocation4], 1
    %s342 = scalar_lea.sflag [#allocation4], 1
    %343 = vsyncpa %s342, 1

</llo_original>
